<compile_context>
chip_gen: v7x
topology: tpu7x:2x2x1
jax: 0.10.0
libtpu: 0.0.40
codegen_flags: <defaults>
</compile_context>

<pallas_src>
import jax
import jax.numpy as jnp
from jax.experimental import pallas as pl
from jax.experimental.pallas import tpu as pltpu


def _swish_f32(z):
    # SwishN with order=1: sigmoid(z) * z, computed as z * 1/(1+exp(-z)).
    # exp and the approximate reciprocal both land on the EUP bundle slot.
    return z * pl.reciprocal(1.0 + jnp.exp(-z), approx=True)


def resblock_kernel(x_ref, w1t_ref, b1_ref, w2t_ref, b2_ref, o_ref):
    """One batch-tile of the ResBlock forward.

    x_ref  : (tm, N)  input tile (f32)
    w1t_ref: (N, N)   lin1 weight, pre-transposed (in, out), MXU dtype (bf16)
    b1_ref : (1, N)   lin1 bias (f32)
    w2t_ref: (N, N)   lin2 weight, pre-transposed (in, out), MXU dtype (bf16)
    b2_ref : (1, N)   lin2 bias (f32)
    o_ref  : (tm, N)  output tile
    """
    x_f32 = x_ref[...].astype(jnp.float32)
    mxu_dtype = w1t_ref.dtype

    # lin1 + swish (bf16 GEMM, f32 accumulation, f32 activation).
    h = jnp.dot(x_f32.astype(mxu_dtype), w1t_ref[...],
                preferred_element_type=jnp.float32)
    h = _swish_f32(h + b1_ref[...])

    # lin2 + residual + swish (residual add in f32).
    z = jnp.dot(h.astype(mxu_dtype), w2t_ref[...],
                preferred_element_type=jnp.float32)
    z = z + b2_ref[...] + x_f32
    o_ref[...] = _swish_f32(z).astype(o_ref.dtype)


def prepare_resblock_params(w1, b1, w2, b2, mxu_dtype=jnp.bfloat16):
    """One-time parameter prep: transpose to (in, out) and cast for the MXU.

    Call this at parameter-creation time, NOT per forward call, so no HBM
    transpose / cast op is emitted on every forward.
    """
    n = w1.shape[0]
    w1t = jnp.asarray(w1.T, dtype=mxu_dtype)
    w2t = jnp.asarray(w2.T, dtype=mxu_dtype)
    b1r = jnp.asarray(b1, dtype=jnp.float32).reshape(1, n)
    b2r = jnp.asarray(b2, dtype=jnp.float32).reshape(1, n)
    return w1t, b1r, w2t, b2r


def _pick_batch_tile(batch, target_steps=8, max_tile=512):
    """Largest multiple-of-8 divisor of `batch` (capped at max_tile) that still
    yields >= target_steps grid steps; degrades gracefully for small batches."""
    candidates = [t for t in range(8, min(batch, max_tile) + 1, 8)
                  if batch % t == 0]
    if not candidates:
        return batch                      # tiny / ragged batch: single tile
    good = [t for t in candidates if batch // t >= target_steps]
    if good:
        return max(good)
    return min(candidates)                # otherwise maximise step count


def resblock_forward(x, w1t, b1r, w2t, b2r, *, tm=None):
    """x: (B, N) f32.  (w1t, b1r, w2t, b2r) come from prepare_resblock_params."""
    B, N = x.shape
    if tm is None:
        tm = _pick_batch_tile(B)
    assert B % tm == 0, (B, tm)

    w_itemsize = jnp.dtype(w1t.dtype).itemsize
    x_itemsize = jnp.dtype(x.dtype).itemsize

    # VMEM budget: single-buffered weights/biases + double-buffered x/out tiles.
    weight_bytes = 2 * N * N * w_itemsize + 2 * N * 4
    io_bytes = 2 * 2 * tm * N * x_itemsize
    vmem_limit = int(min(max(2 * (weight_bytes + io_bytes), 32 * 1024 * 1024),
                         48 * 1024 * 1024))   # keep headroom on v7x (64 MiB)

    cost = pl.CostEstimate(
        flops=int(2 * 2 * B * N * N + 8 * B * N),      # two GEMMs + elementwise
        transcendentals=int(2 * B * N),                # two swishes (exp each)
        bytes_accessed=int(2 * B * N * x_itemsize + weight_bytes),
    )

    grid = (B // tm,)
    resident = dict(pipeline_mode=pl.Buffered(1))      # constant-index blocks

    return pl.pallas_call(
        resblock_kernel,
        out_shape=jax.ShapeDtypeStruct((B, N), x.dtype),
        grid_spec=pltpu.PrefetchScalarGridSpec(
            num_scalar_prefetch=0,
            grid=grid,
            in_specs=[
                pl.BlockSpec((tm, N), lambda i: (i, 0)),             # x tile
                pl.BlockSpec((N, N), lambda i: (0, 0), **resident),  # W1.T
                pl.BlockSpec((1, N), lambda i: (0, 0), **resident),  # b1
                pl.BlockSpec((N, N), lambda i: (0, 0), **resident),  # W2.T
                pl.BlockSpec((1, N), lambda i: (0, 0), **resident),  # b2
            ],
            out_specs=pl.BlockSpec((tm, N), lambda i: (i, 0)),
        ),
        compiler_params=pltpu.CompilerParams(
            dimension_semantics=("parallel",),   # megacore-shardable batch axis
            vmem_limit_bytes=vmem_limit,
        ),
        cost_estimate=cost,
    )(x, w1t, b1r, w2t, b2r)


def resblock_reference(x, w1, b1, w2, b2):
    """Pure-JAX f32 reference matching PyTorch ResBlock semantics."""
    h = x @ w1.T + b1
    h = jax.nn.sigmoid(h) * h
    z = h @ w2.T + b2 + x
    return jax.nn.sigmoid(z) * z


if __name__ == "__main__":
    key = jax.random.PRNGKey(0)
    k_x, k_w1, k_b1, k_w2, k_b2 = jax.random.split(key, 5)

    batch = 64         # -> 8 grid steps of tm=8 (pipelined, megacore-shardable)
    n_neurons = 128    # lane-dense: full 128-lane vregs, unmasked output stores

    # Deterministic synthetic parameters (PyTorch-like uniform(-1/sqrt(n), 1/sqrt(n)))
    bound = 1.0 / float(n_neurons) ** 0.5
    x = jax.random.normal(k_x, (batch, n_neurons), dtype=jnp.float32)
    w1 = jax.random.uniform(k_w1, (n_neurons, n_neurons), jnp.float32, -bound, bound)
    b1 = jax.random.uniform(k_b1, (n_neurons,), jnp.float32, -bound, bound)
    w2 = jax.random.uniform(k_w2, (n_neurons, n_neurons), jnp.float32, -bound, bound)
    b2 = jax.random.uniform(k_b2, (n_neurons,), jnp.float32, -bound, bound)

    # One-time parameter prep (transpose + bf16 cast), hoisted out of the
    # per-call forward path.
    params = prepare_resblock_params(w1, b1, w2, b2)

    fwd = jax.jit(resblock_forward)
    out = jax.block_until_ready(fwd(x, *params))

    ref = resblock_reference(x, w1, b1, w2, b2)
    assert out.shape == (batch, n_neurons)
    max_err = float(jnp.max(jnp.abs(out - ref)))
    # bf16 MXU inputs + approximate reciprocal => looser tolerance than pure f32.
    assert max_err < 5e-2, f"max abs err = {max_err}"

    print("KERNEL_OK")
</pallas_src>

<mosaic_0001>
module attributes {stable_mosaic.version = 11 : i64} {
  func.func @resblock_kernel(%arg0: i32, %arg1: memref<8x128xf32, #tpu.memory_space<vmem>>, %arg2: memref<128x128xbf16, #tpu.memory_space<vmem>>, %arg3: memref<1x128xf32, #tpu.memory_space<vmem>>, %arg4: memref<128x128xbf16, #tpu.memory_space<vmem>>, %arg5: memref<1x128xf32, #tpu.memory_space<vmem>>, %arg6: memref<8x128xf32, #tpu.memory_space<vmem>>) attributes {dimension_semantics = [#tpu.dimension_semantics<parallel>], iteration_bounds = array<i64: 8>, scalar_prefetch = 0 : i64, scratch_operands = 0 : i64, tpu.core_type = #tpu.core_type<tc>, window_params = [{transform_indices = @transform_0, window_bounds = array<i64: 8, 128>}, {pipeline_mode = #tpu.pipeline_mode<synchronous>, transform_indices = @transform_1, window_bounds = array<i64: 128, 128>}, {pipeline_mode = #tpu.pipeline_mode<synchronous>, transform_indices = @transform_2, window_bounds = array<i64: 1, 128>}, {pipeline_mode = #tpu.pipeline_mode<synchronous>, transform_indices = @transform_3, window_bounds = array<i64: 128, 128>}, {pipeline_mode = #tpu.pipeline_mode<synchronous>, transform_indices = @transform_4, window_bounds = array<i64: 1, 128>}, {transform_indices = @transform_5, window_bounds = array<i64: 8, 128>}]} {
    %c0 = arith.constant 0 : index
    %c0_0 = arith.constant 0 : index
    %0 = vector.load %arg1[%c0, %c0_0] : memref<8x128xf32, #tpu.memory_space<vmem>>, vector<8x128xf32>
    %1 = arith.truncf %0 : vector<8x128xf32> to vector<8x128xbf16>
    %c0_1 = arith.constant 0 : index
    %c0_2 = arith.constant 0 : index
    %2 = vector.load %arg2[%c0_1, %c0_2] : memref<128x128xbf16, #tpu.memory_space<vmem>>, vector<128x128xbf16>
    %cst = arith.constant dense<0.000000e+00> : vector<8x128xf32>
    %3 = tpu.matmul %1, %2, %cst {dimension_numbers = #tpu.dot_dimension_numbers<[1], [0], [0], [1], [0, 0, 1, 1], [], []>} : vector<8x128xbf16>, vector<128x128xbf16>, vector<8x128xf32> -> vector<8x128xf32>
    %c0_3 = arith.constant 0 : index
    %c0_4 = arith.constant 0 : index
    %4 = vector.load %arg3[%c0_3, %c0_4] : memref<1x128xf32, #tpu.memory_space<vmem>>, vector<1x128xf32>
    %5 = vector.broadcast %4 : vector<1x128xf32> to vector<8x128xf32>
    %6 = arith.addf %3, %5 : vector<8x128xf32>
    %cst_5 = arith.constant 0.000000e+00 : f32
    %7 = vector.broadcast %cst_5 : f32 to vector<8x128xf32>
    %8 = arith.subf %7, %6 : vector<8x128xf32>
    %9 = math.exp %8 : vector<8x128xf32>
    %cst_6 = arith.constant 1.000000e+00 : f32
    %10 = vector.broadcast %cst_6 : f32 to vector<8x128xf32>
    %11 = arith.addf %10, %9 : vector<8x128xf32>
    %12 = tpu.reciprocal %11 {approx = true} : vector<8x128xf32> -> vector<8x128xf32>
    %13 = arith.mulf %6, %12 : vector<8x128xf32>
    %14 = arith.truncf %13 : vector<8x128xf32> to vector<8x128xbf16>
    %c0_7 = arith.constant 0 : index
    %c0_8 = arith.constant 0 : index
    %15 = vector.load %arg4[%c0_7, %c0_8] : memref<128x128xbf16, #tpu.memory_space<vmem>>, vector<128x128xbf16>
    %cst_9 = arith.constant dense<0.000000e+00> : vector<8x128xf32>
    %16 = tpu.matmul %14, %15, %cst_9 {dimension_numbers = #tpu.dot_dimension_numbers<[1], [0], [0], [1], [0, 0, 1, 1], [], []>} : vector<8x128xbf16>, vector<128x128xbf16>, vector<8x128xf32> -> vector<8x128xf32>
    %c0_10 = arith.constant 0 : index
    %c0_11 = arith.constant 0 : index
    %17 = vector.load %arg5[%c0_10, %c0_11] : memref<1x128xf32, #tpu.memory_space<vmem>>, vector<1x128xf32>
    %18 = vector.broadcast %17 : vector<1x128xf32> to vector<8x128xf32>
    %19 = arith.addf %16, %18 : vector<8x128xf32>
    %20 = arith.addf %19, %0 : vector<8x128xf32>
    %cst_12 = arith.constant 0.000000e+00 : f32
    %21 = vector.broadcast %cst_12 : f32 to vector<8x128xf32>
    %22 = arith.subf %21, %20 : vector<8x128xf32>
    %23 = math.exp %22 : vector<8x128xf32>
    %cst_13 = arith.constant 1.000000e+00 : f32
    %24 = vector.broadcast %cst_13 : f32 to vector<8x128xf32>
    %25 = arith.addf %24, %23 : vector<8x128xf32>
    %26 = tpu.reciprocal %25 {approx = true} : vector<8x128xf32> -> vector<8x128xf32>
    %27 = arith.mulf %20, %26 : vector<8x128xf32>
    %c0_14 = arith.constant 0 : index
    %c0_15 = arith.constant 0 : index
    %28 = vector.load %arg6[%c0_14, %c0_15] : memref<8x128xf32, #tpu.memory_space<vmem>>, vector<8x128xf32>
    tpu.vector_store %arg6[%c0_14, %c0_15], %27 {strides = array<i32>} : memref<8x128xf32, #tpu.memory_space<vmem>>, vector<8x128xf32>,
    return
  }
  func.func @transform_0(%arg0: i32) -> (i32, i32) {
    %c0_i32 = arith.constant 0 : i32
    %c0_i32_0 = arith.constant 0 : i32
    return %arg0, %c0_i32 : i32, i32
  }
  func.func @transform_1(%arg0: i32) -> (i32, i32) {
    %c0_i32 = arith.constant 0 : i32
    %c0_i32_0 = arith.constant 0 : i32
    %c0_i32_1 = arith.constant 0 : i32
    return %c0_i32, %c0_i32_0 : i32, i32
  }
  func.func @transform_2(%arg0: i32) -> (i32, i32) {
    %c0_i32 = arith.constant 0 : i32
    %c0_i32_0 = arith.constant 0 : i32
    %c0_i32_1 = arith.constant 0 : i32
    return %c0_i32, %c0_i32_0 : i32, i32
  }
  func.func @transform_3(%arg0: i32) -> (i32, i32) {
    %c0_i32 = arith.constant 0 : i32
    %c0_i32_0 = arith.constant 0 : i32
    %c0_i32_1 = arith.constant 0 : i32
    return %c0_i32, %c0_i32_0 : i32, i32
  }
  func.func @transform_4(%arg0: i32) -> (i32, i32) {
    %c0_i32 = arith.constant 0 : i32
    %c0_i32_0 = arith.constant 0 : i32
    %c0_i32_1 = arith.constant 0 : i32
    return %c0_i32, %c0_i32_0 : i32, i32
  }
  func.func @transform_5(%arg0: i32) -> (i32, i32) {
    %c0_i32 = arith.constant 0 : i32
    %c0_i32_0 = arith.constant 0 : i32
    return %arg0, %c0_i32 : i32, i32
  }
}

</mosaic_0001>

<llo_original>
// kernel: resblock_forward.1
$region0: #{resblock_forward.1}
  #allocation0 [shape = 'u32[]', space=smem, size = 0x4, offset = 0x4, fixed_abs, tag = 'smem constant byte address 0x4 - core index']
  #allocation1 [shape = 'u32[144,128]{1,0:T(1,128)}', space=vmem, size = 0x12000, scoped, tag = 'internal scratch']
  %s0 = inlined_call_operand.hbm [shape: f32[64,128], index: 0, kind: input, shape index: {}]
  %s1 = inlined_call_operand.hbm [shape: bf16[128,128], index: 1, kind: input, shape index: {}]
  %s2 = inlined_call_operand.vmem [shape: f32[1,128], index: 2, kind: input, shape index: {}]
  %s3 = inlined_call_operand.hbm [shape: bf16[128,128], index: 3, kind: input, shape index: {}]
  %s4 = inlined_call_operand.vmem [shape: f32[1,128], index: 4, kind: input, shape index: {}]
  %s5 = inlined_call_operand.hbm [shape: f32[64,128], index: 5, kind: output, shape index: {}]
  %s6 = sld [smem:[#allocation0]]
  $region65: #{resblock_forward.1} parent=0
    _
  %s8 = ssub.s32 1, %s6
  %s9 = scalar_select 0, %s8, %s6
  $region1: #{resblock_forward.1} parent=0
    #allocation2 [shape = 'u8[8192]{0}', space=vmem, size = 0x2000, scoped, tag = 'input window, operand 0']
    #allocation3 [shape = 's32[2]{0}', space=sflag, size = 0x8, scoped, tag = 'scoped memory for resblock_forward.1']
    #allocation4 [shape = 's32[2]{0}', space=sflag, size = 0x8, scoped, tag = 'scoped memory for resblock_forward.1']
    #allocation5 [shape = 'u8[32768]{0}', space=vmem, size = 0x8000, scoped, tag = 'input window, operand 1, single buffered']
    #allocation6 [shape = 's32[1]{0}', space=sflag, size = 0x4, scoped, tag = 'scoped memory for resblock_forward.1']
    #allocation7 [shape = 'u8[32768]{0}', space=vmem, size = 0x8000, scoped, tag = 'input window, operand 3, single buffered']
    #allocation8 [shape = 'u8[8192]{0}', space=vmem, size = 0x2000, scoped, tag = 'output window, operand 0']
    %10 = vsyncpa [#allocation3], 0
    %s11 = scalar_lea.sflag [#allocation3], 1
    %12 = vsyncpa %s11, 0
    %13 = vsyncpa [#allocation6], 0
    %14 = vsyncpa [#allocation4], 0
    %s15 = scalar_lea.sflag [#allocation4], 1
    %16 = vsyncpa %s15, 0
    loop: start=0, step=1, limit=10
    $region2: #{resblock_forward.1} parent=1 // loop_pre_header
      _
    $region3: #{resblock_forward.1} parent=1 // loop_header
      %s18 = sphi 0, %s22
      %p19 = scmp.ge.s32.totalorder %s18, 10
      %s28 = sphi 0, %s30
      %s31 = sphi 0, %s28
      %s32 = sphi 0, %s31
      %s48 = sphi 0, %s32
      %s52 = sphi 0, %s52
      %s54 = sphi 0, %s52
      %s55 = sphi 0, %s54
      %s69 = sphi 0, %s55
      %s73 = sphi 0, %s73
      %s75 = sphi 0, %s73
      %s76 = sphi 0, %s75
      %s90 = sphi 0, %s76
      %s94 = sphi 0, %s94
      %s96 = sphi 0, %s94
      %s97 = sphi 0, %s96
      %s111 = sphi 0, %s97
      %s115 = sphi 0, %s115
      %s117 = sphi 0, %s115
      %s118 = sphi 0, %s117
      %s132 = sphi 0, %s118
      %s138 = sphi 0, %s140
      %s141 = sphi 0, %s138
      %s142 = sphi 0, %s141
      %s158 = sphi 0, %s142
    $region4: #{resblock_forward.1} parent=1 // loop_header_branch
      %21 = sbr.rel (%p19) target = $region8
    $region5: #{resblock_forward.1} parent=1 // loop_body
      %s23 = ssub.s32 %s18, 1
      %s24 = ssub.s32 %s18, 2
      %s25 = sadd.s32 %s18, 1
      %s26 = ssub.s32 %s18, %s25
      %p27 = scmp.eq.s32.totalorder %s26, 0
      %s29 = sadd.s32 %s28, 1
      %s30 = scalar_select %p27, %s28, %s29
      %p33 = pneg %p27
      %p34 = scmp.eq.s32.totalorder %s18, 7
      %p35 = por %p33, %p34
      %p36 = scmp.ne.s32.totalorder %s28, %s31
      %p37 = scmp.eq.s32.totalorder %s18, 0
      %p38 = por %p36, %p37
      %p39 = scmp.ne.s32.totalorder %s28, %s31
      %p40 = scmp.eq.s32.totalorder %s23, 7
      %p41 = por %p39, %p40
      %p42 = scmp.ne.s32.totalorder %s31, %s32
      %p43 = scmp.eq.s32.totalorder %s23, 0
      %p44 = por %p42, %p43
      %p45 = scmp.ne.s32.totalorder %s31, %s32
      %p46 = scmp.eq.s32.totalorder %s24, 7
      %p47 = por %p45, %p46
      %p49 = scmp.ne.s32.totalorder %s32, %s48
      %p50 = scmp.eq.s32.totalorder %s24, 0
      %p51 = por %p49, %p50
      %s53 = sadd.s32 %s52, 1
      %p56 = scmp.eq.s32.totalorder %s18, 7
      %p57 = scmp.ne.s32.totalorder %s52, %s54
      %p58 = scmp.eq.s32.totalorder %s18, 0
      %p59 = por %p57, %p58
      %p60 = scmp.ne.s32.totalorder %s52, %s54
      %p61 = scmp.eq.s32.totalorder %s23, 7
      %p62 = por %p60, %p61
      %p63 = scmp.ne.s32.totalorder %s54, %s55
      %p64 = scmp.eq.s32.totalorder %s23, 0
      %p65 = por %p63, %p64
      %p66 = scmp.ne.s32.totalorder %s54, %s55
      %p67 = scmp.eq.s32.totalorder %s24, 7
      %p68 = por %p66, %p67
      %p70 = scmp.ne.s32.totalorder %s55, %s69
      %p71 = scmp.eq.s32.totalorder %s24, 0
      %p72 = por %p70, %p71
      %s74 = sadd.s32 %s73, 1
      %p77 = scmp.eq.s32.totalorder %s18, 7
      %p78 = scmp.ne.s32.totalorder %s73, %s75
      %p79 = scmp.eq.s32.totalorder %s18, 0
      %p80 = por %p78, %p79
      %p81 = scmp.ne.s32.totalorder %s73, %s75
      %p82 = scmp.eq.s32.totalorder %s23, 7
      %p83 = por %p81, %p82
      %p84 = scmp.ne.s32.totalorder %s75, %s76
      %p85 = scmp.eq.s32.totalorder %s23, 0
      %p86 = por %p84, %p85
      %p87 = scmp.ne.s32.totalorder %s75, %s76
      %p88 = scmp.eq.s32.totalorder %s24, 7
      %p89 = por %p87, %p88
      %p91 = scmp.ne.s32.totalorder %s76, %s90
      %p92 = scmp.eq.s32.totalorder %s24, 0
      %p93 = por %p91, %p92
      %s95 = sadd.s32 %s94, 1
      %p98 = scmp.eq.s32.totalorder %s18, 7
      %p99 = scmp.ne.s32.totalorder %s94, %s96
      %p100 = scmp.eq.s32.totalorder %s18, 0
      %p101 = por %p99, %p100
      %p102 = scmp.ne.s32.totalorder %s94, %s96
      %p103 = scmp.eq.s32.totalorder %s23, 7
      %p104 = por %p102, %p103
      %p105 = scmp.ne.s32.totalorder %s96, %s97
      %p106 = scmp.eq.s32.totalorder %s23, 0
      %p107 = por %p105, %p106
      %p108 = scmp.ne.s32.totalorder %s96, %s97
      %p109 = scmp.eq.s32.totalorder %s24, 7
      %p110 = por %p108, %p109
      %p112 = scmp.ne.s32.totalorder %s97, %s111
      %p113 = scmp.eq.s32.totalorder %s24, 0
      %p114 = por %p112, %p113
      %s116 = sadd.s32 %s115, 1
      %p119 = scmp.eq.s32.totalorder %s18, 7
      %p120 = scmp.ne.s32.totalorder %s115, %s117
      %p121 = scmp.eq.s32.totalorder %s18, 0
      %p122 = por %p120, %p121
      %p123 = scmp.ne.s32.totalorder %s115, %s117
      %p124 = scmp.eq.s32.totalorder %s23, 7
      %p125 = por %p123, %p124
      %p126 = scmp.ne.s32.totalorder %s117, %s118
      %p127 = scmp.eq.s32.totalorder %s23, 0
      %p128 = por %p126, %p127
      %p129 = scmp.ne.s32.totalorder %s117, %s118
      %p130 = scmp.eq.s32.totalorder %s24, 7
      %p131 = por %p129, %p130
      %p133 = scmp.ne.s32.totalorder %s118, %s132
      %p134 = scmp.eq.s32.totalorder %s24, 0
      %p135 = por %p133, %p134
      %s136 = ssub.s32 %s18, %s25
      %p137 = scmp.eq.s32.totalorder %s136, 0
      %s139 = sadd.s32 %s138, 1
      %s140 = scalar_select %p137, %s138, %s139
      %p143 = pneg %p137
      %p144 = scmp.eq.s32.totalorder %s18, 7
      %p145 = por %p143, %p144
      %p146 = scmp.ne.s32.totalorder %s138, %s141
      %p147 = scmp.eq.s32.totalorder %s18, 0
      %p148 = por %p146, %p147
      %p149 = scmp.ne.s32.totalorder %s138, %s141
      %p150 = scmp.eq.s32.totalorder %s23, 7
      %p151 = por %p149, %p150
      %p152 = scmp.ne.s32.totalorder %s141, %s142
      %p153 = scmp.eq.s32.totalorder %s23, 0
      %p154 = por %p152, %p153
      %p155 = scmp.ne.s32.totalorder %s141, %s142
      %p156 = scmp.eq.s32.totalorder %s24, 7
      %p157 = por %p155, %p156
      %p159 = scmp.ne.s32.totalorder %s142, %s158
      %p160 = scmp.eq.s32.totalorder %s24, 0
      %p161 = por %p159, %p160
      %p162 = scmp.le.s32.totalorder 1, %s18
      %p163 = scmp.lt.s32.totalorder %s18, 9
      %p164 = pnand %p162, %p163
      %p165 = pneg %p164
      // Predicated region
      $region9: #{resblock_forward.1} parent=5 // pred_check
        _
      $region10: #{resblock_forward.1} parent=5 // pred_check_branch
        %167 = sbr.rel (%p164) target = $region12
      $region11: #{resblock_forward.1} parent=5 // pred_region
        %s168 = ssub.s32 %s18, 1
        // Predicated region
        $region13: #{resblock_forward.1} parent=11 // pred_check
          %p169 = pneg %p65
        $region14: #{resblock_forward.1} parent=11 // pred_check_branch
          %171 = sbr.rel (%p169) target = $region16
        $region15: #{resblock_forward.1} parent=11 // pred_region
          %s173 = ssub.s32 1024, 1024
          %174 = vsyncadd [#allocation6], %s173
          %s175 = sshll.u32 [#allocation5], 4
          %s176 = int_to_ptr.vmem [resolvable:$true] %s175
          %181 = dma.hbm_to_vmem [thread:$0]  %s1, 1024, %s176, [#allocation6], 64, 64, 4
        $region16: #{resblock_forward.1} parent=11 // pred_fallthru
          _
        // Predicated region
        $region17: #{resblock_forward.1} parent=11 // pred_check
          %p182 = pneg %p86
        $region18: #{resblock_forward.1} parent=11 // pred_check_branch
          %184 = sbr.rel (%p182) target = $region20
        $region19: #{resblock_forward.1} parent=11 // pred_region
          _
        $region20: #{resblock_forward.1} parent=11 // pred_fallthru
          _
        // Predicated region
        $region21: #{resblock_forward.1} parent=11 // pred_check
          %p185 = pneg %p107
        $region22: #{resblock_forward.1} parent=11 // pred_check_branch
          %187 = sbr.rel (%p185) target = $region24
        $region23: #{resblock_forward.1} parent=11 // pred_region
          %s189 = ssub.s32 1024, 1024
          %190 = vsyncadd [#allocation6], %s189
          %s191 = sshll.u32 [#allocation7], 4
          %s192 = int_to_ptr.vmem [resolvable:$true] %s191
          %197 = dma.hbm_to_vmem [thread:$0]  %s3, 1024, %s192, [#allocation6], 64, 64, 4
        $region24: #{resblock_forward.1} parent=11 // pred_fallthru
          _
        // Predicated region
        $region25: #{resblock_forward.1} parent=11 // pred_check
          %p198 = pneg %p128
        $region26: #{resblock_forward.1} parent=11 // pred_check_branch
          %200 = sbr.rel (%p198) target = $region28
        $region27: #{resblock_forward.1} parent=11 // pred_region
          _
        $region28: #{resblock_forward.1} parent=11 // pred_fallthru
          _
      $region12: #{resblock_forward.1} parent=5 // pred_fallthru
        _
      %p201 = scmp.lt.s32.totalorder %s18, 8
      // Predicated region
      $region29: #{resblock_forward.1} parent=5 // pred_check
        %p202 = pneg %p201
      $region30: #{resblock_forward.1} parent=5 // pred_check_branch
        %204 = sbr.rel (%p202) target = $region32
      $region31: #{resblock_forward.1} parent=5 // pred_region
        // Predicated region
        $region33: #{resblock_forward.1} parent=31 // pred_check
          %p205 = pneg %p38
        $region34: #{resblock_forward.1} parent=31 // pred_check_branch
          %207 = sbr.rel (%p205) target = $region36
        $region35: #{resblock_forward.1} parent=31 // pred_region
          %s208 = sand.u32 %s28, 1
          %s209 = scalar_lea.sflag [#allocation3], %s208
          %s210 = sand.u32 %s28, 1
          %s211 = smul.addr %s210, 8
          %s212 = scalar_lea.vmem [#allocation2], %s211
          %s214 = ssub.s32 128, 128
          %215 = vsyncadd %s209, %s214
          %s216 = smul.addr %s18, 128
          %s217 = scalar_lea.hbm %s0, %s216
          %s219 = sshll.u32 %s212, 4
          %s220 = int_to_ptr.vmem [resolvable:$true] %s219
          %222 = dma.hbm_to_vmem [thread:$0]  %s217, 128, %s220, %s209
        $region36: #{resblock_forward.1} parent=31 // pred_fallthru
          _
      $region32: #{resblock_forward.1} parent=5 // pred_fallthru
        _
      %p223 = scmp.le.s32.totalorder 1, %s18
      %p224 = scmp.lt.s32.totalorder %s18, 9
      %p225 = pnand %p223, %p224
      %p226 = pneg %p225
      // Predicated region
      $region37: #{resblock_forward.1} parent=5 // pred_check
        _
      $region38: #{resblock_forward.1} parent=5 // pred_check_branch
        %228 = sbr.rel (%p225) target = $region40
      $region39: #{resblock_forward.1} parent=5 // pred_region
        %s229 = ssub.s32 %s18, 1
        %s230 = sand.u32 %s31, 1
        %s231 = scalar_lea.sflag [#allocation3], %s230
        %s232 = sand.u32 %s31, 1
        %s233 = smul.addr %s232, 8
        %s234 = scalar_lea.vmem [#allocation2], %s233
        // Predicated region
        $region41: #{resblock_forward.1} parent=39 // pred_check
          %p235 = pneg %p44
        $region42: #{resblock_forward.1} parent=39 // pred_check_branch
          %237 = sbr.rel (%p235) target = $region44
        $region43: #{resblock_forward.1} parent=39 // pred_region
          %238 = dma.done %s231, 128
        $region44: #{resblock_forward.1} parent=39 // pred_fallthru
          _
        // Predicated region
        $region45: #{resblock_forward.1} parent=39 // pred_check
          %p239 = pneg %p65
        $region46: #{resblock_forward.1} parent=39 // pred_check_branch
          %241 = sbr.rel (%p239) target = $region48
        $region47: #{resblock_forward.1} parent=39 // pred_region
          %242 = dma.done [#allocation6], 1024
        $region48: #{resblock_forward.1} parent=39 // pred_fallthru
          _
        // Predicated region
        $region49: #{resblock_forward.1} parent=39 // pred_check
          %p243 = pneg %p107
        $region50: #{resblock_forward.1} parent=39 // pred_check_branch
          %245 = sbr.rel (%p243) target = $region52
        $region51: #{resblock_forward.1} parent=39 // pred_region
          %246 = dma.done [#allocation6], 1024
        $region52: #{resblock_forward.1} parent=39 // pred_fallthru
          _
        %s247 = sand.u32 %s31, 1
        %s248 = scalar_lea.sflag [#allocation3], %s247
        %s249 = sand.u32 %s31, 1
        %s250 = smul.addr %s249, 8
        %s251 = scalar_lea.vmem [#allocation2], %s250
        %p252 = pneg %p44
        %p253 = pneg %p41
        %p254 = pneg %p65
        %p255 = pneg %p62
        %p256 = pneg %p86
        %p257 = pneg %p83
        %p258 = pneg %p107
        %p259 = pneg %p104
        %p260 = pneg %p128
        %p261 = pneg %p125
        %p262 = pneg %p154
        %p263 = pneg %p151
        %s264 = sand.u32 %s141, 1
        %s265 = scalar_lea.sflag [#allocation4], %s264
        %s266 = sand.u32 %s141, 1
        %s267 = smul.addr %s266, 8
        %s268 = scalar_lea.vmem [#allocation8], %s267
        %v270 = vld [vmem:[%s234] sm:$0xff]
        %v271 = vpack.c.bf16 %v270, %v270
        %v272 = vld [vmem:[#allocation5] sm:$0xf]
        %v273 = vld [vmem:[#allocation5 + $0x4] sm:$0xf]
        %v274 = vld [vmem:[#allocation5 + $0x8] sm:$0xf]
        %v275 = vld [vmem:[#allocation5 + $0xc] sm:$0xf]
        %v276 = vld [vmem:[#allocation5 + $0x10] sm:$0xf]
        %v277 = vld [vmem:[#allocation5 + $0x14] sm:$0xf]
        %v278 = vld [vmem:[#allocation5 + $0x18] sm:$0xf]
        %v279 = vld [vmem:[#allocation5 + $0x1c] sm:$0xf]
        %v280 = vld [vmem:[#allocation5 + $0x20] sm:$0xf]
        %v281 = vld [vmem:[#allocation5 + $0x24] sm:$0xf]
        %v282 = vld [vmem:[#allocation5 + $0x28] sm:$0xf]
        %v283 = vld [vmem:[#allocation5 + $0x2c] sm:$0xf]
        %v284 = vld [vmem:[#allocation5 + $0x30] sm:$0xf]
        %v285 = vld [vmem:[#allocation5 + $0x34] sm:$0xf]
        %v286 = vld [vmem:[#allocation5 + $0x38] sm:$0xf]
        %v287 = vld [vmem:[#allocation5 + $0x3c] sm:$0xf]
        %v288 = vld [vmem:[%s2] sm:$0x1]
        %v290 = vlaneseq
        %v291 = vshrl.u32 %v290, 7
        %v292 = vsub.s32 0, %v291
        %v293 = vrot.slane %v288, %v292
        %v311 = vunpack.c.l.b16 %v272
        %v312 = vunpack.c.l.b16 %v273
        %v313 = vunpack.c.l.b16 %v274
        %v314 = vunpack.c.l.b16 %v275
        %v315 = vunpack.c.l.b16 %v276
        %v316 = vunpack.c.l.b16 %v277
        %v317 = vunpack.c.l.b16 %v278
        %v318 = vunpack.c.l.b16 %v279
        %v319 = vunpack.c.l.b16 %v280
        %v320 = vunpack.c.l.b16 %v281
        %v321 = vunpack.c.l.b16 %v282
        %v322 = vunpack.c.l.b16 %v283
        %v323 = vunpack.c.l.b16 %v284
        %v324 = vunpack.c.l.b16 %v285
        %v325 = vunpack.c.l.b16 %v286
        %v326 = vunpack.c.l.b16 %v287
        %v327 = vpack.c.b16 %v312, %v311
        %v328 = vpack.c.b16 %v314, %v313
        %v329 = vpack.c.b16 %v316, %v315
        %v330 = vpack.c.b16 %v318, %v317
        %v331 = vpack.c.b16 %v320, %v319
        %v332 = vpack.c.b16 %v322, %v321
        %v333 = vpack.c.b16 %v324, %v323
        %v334 = vpack.c.b16 %v326, %v325
        %343 = vmatprep.subr.bf16.mxu0 0
        %344 = vmatpush1.bf16.msra.mxu0 %v327
        %345 = vmatprep.subr.bf16.mxu0 0
        %346 = vmatpush1.bf16.msra.mxu0 %v328
        %347 = vmatprep.subr.bf16.mxu0 0
        %348 = vmatpush1.bf16.msra.mxu0 %v329
        %349 = vmatprep.subr.bf16.mxu0 0
        %350 = vmatpush1.bf16.msra.mxu0 %v330
        %351 = vmatprep.subr.bf16.mxu0 0
        %352 = vmatpush1.bf16.msra.mxu0 %v331
        %353 = vmatprep.subr.bf16.mxu0 0
        %354 = vmatpush1.bf16.msra.mxu0 %v332
        %355 = vmatprep.subr.bf16.mxu0 0
        %356 = vmatpush1.bf16.msra.mxu0 %v333
        %357 = vmatprep.subr.bf16.mxu0 0
        %358 = vmatpush1.bf16.msra.mxu0 %v334
        %359 = vmatprep.subr.bf16.mxu0 0
        %360 = vmatpush1.bf16.msra.mxu0 0
        %361 = vmatprep.subr.bf16.mxu0 0
        %362 = vmatpush1.bf16.msra.mxu0 0
        %363 = vmatprep.subr.bf16.mxu0 0
        %364 = vmatpush1.bf16.msra.mxu0 0
        %365 = vmatprep.subr.bf16.mxu0 0
        %366 = vmatpush1.bf16.msra.mxu0 0
        %367 = vmatprep.subr.bf16.mxu0 0
        %368 = vmatpush1.bf16.msra.mxu0 0
        %369 = vmatprep.subr.bf16.mxu0 0
        %370 = vmatpush1.bf16.msra.mxu0 0
        %371 = vmatprep.subr.bf16.mxu0 0
        %372 = vmatpush1.bf16.msra.mxu0 0
        %373 = vmatprep.subr.bf16.mxu0 0
        %374 = vmatpush1.bf16.msra.mxu0 0
        %375 = vmatprep.mubr.bf16.mxu0 0
        %376 = vmatmul.mubr.bf16.gmra.mrb[0].mxu0 %v271
        %v377 = vpop.f32.mrb[0].mxu0
        %v378 = vadd.f32 %v293, %v377
        %v379 = vpop.f32.mrb[0].mxu0
        %v380 = vpop.f32.mrb[0].mxu0
        %v381 = vpop.f32.mrb[0].mxu0
        %382 = vdwg.mxu0
        %v383 = vsub.f32 0.0, %v378
        %v384 = vmul.f32 %v383, 1.442695
        %v385 = vpow.pop %v384
        %v386 = vadd.f32 %v385, 1.0
        %v387 = vrcp.pop %v386
        %v388 = vmul.f32 %v378, %v387
        %v389 = vpack.c.bf16 %v388, %v388
        %v390 = vld [vmem:[#allocation7] sm:$0xf]
        %v391 = vld [vmem:[#allocation7 + $0x4] sm:$0xf]
        %v392 = vld [vmem:[#allocation7 + $0x8] sm:$0xf]
        %v393 = vld [vmem:[#allocation7 + $0xc] sm:$0xf]
        %v394 = vld [vmem:[#allocation7 + $0x10] sm:$0xf]
        %v395 = vld [vmem:[#allocation7 + $0x14] sm:$0xf]
        %v396 = vld [vmem:[#allocation7 + $0x18] sm:$0xf]
        %v397 = vld [vmem:[#allocation7 + $0x1c] sm:$0xf]
        %v398 = vld [vmem:[#allocation7 + $0x20] sm:$0xf]
        %v399 = vld [vmem:[#allocation7 + $0x24] sm:$0xf]
        %v400 = vld [vmem:[#allocation7 + $0x28] sm:$0xf]
        %v401 = vld [vmem:[#allocation7 + $0x2c] sm:$0xf]
        %v402 = vld [vmem:[#allocation7 + $0x30] sm:$0xf]
        %v403 = vld [vmem:[#allocation7 + $0x34] sm:$0xf]
        %v404 = vld [vmem:[#allocation7 + $0x38] sm:$0xf]
        %v405 = vld [vmem:[#allocation7 + $0x3c] sm:$0xf]
        %v406 = vld [vmem:[%s4] sm:$0x1]
        %v408 = vlaneseq
        %v409 = vshrl.u32 %v408, 7
        %v410 = vsub.s32 0, %v409
        %v411 = vrot.slane %v406, %v410
        %v429 = vunpack.c.l.b16 %v390
        %v430 = vunpack.c.l.b16 %v391
        %v431 = vunpack.c.l.b16 %v392
        %v432 = vunpack.c.l.b16 %v393
        %v433 = vunpack.c.l.b16 %v394
        %v434 = vunpack.c.l.b16 %v395
        %v435 = vunpack.c.l.b16 %v396
        %v436 = vunpack.c.l.b16 %v397
        %v437 = vunpack.c.l.b16 %v398
        %v438 = vunpack.c.l.b16 %v399
        %v439 = vunpack.c.l.b16 %v400
        %v440 = vunpack.c.l.b16 %v401
        %v441 = vunpack.c.l.b16 %v402
        %v442 = vunpack.c.l.b16 %v403
        %v443 = vunpack.c.l.b16 %v404
        %v444 = vunpack.c.l.b16 %v405
        %v445 = vpack.c.b16 %v430, %v429
        %v446 = vpack.c.b16 %v432, %v431
        %v447 = vpack.c.b16 %v434, %v433
        %v448 = vpack.c.b16 %v436, %v435
        %v449 = vpack.c.b16 %v438, %v437
        %v450 = vpack.c.b16 %v440, %v439
        %v451 = vpack.c.b16 %v442, %v441
        %v452 = vpack.c.b16 %v444, %v443
        %461 = vmatprep.subr.bf16.mxu0 0
        %462 = vmatpush1.bf16.msra.mxu0 %v445
        %463 = vmatprep.subr.bf16.mxu0 0
        %464 = vmatpush1.bf16.msra.mxu0 %v446
        %465 = vmatprep.subr.bf16.mxu0 0
        %466 = vmatpush1.bf16.msra.mxu0 %v447
        %467 = vmatprep.subr.bf16.mxu0 0
        %468 = vmatpush1.bf16.msra.mxu0 %v448
        %469 = vmatprep.subr.bf16.mxu0 0
        %470 = vmatpush1.bf16.msra.mxu0 %v449
        %471 = vmatprep.subr.bf16.mxu0 0
        %472 = vmatpush1.bf16.msra.mxu0 %v450
        %473 = vmatprep.subr.bf16.mxu0 0
        %474 = vmatpush1.bf16.msra.mxu0 %v451
        %475 = vmatprep.subr.bf16.mxu0 0
        %476 = vmatpush1.bf16.msra.mxu0 %v452
        %477 = vmatprep.subr.bf16.mxu0 0
        %478 = vmatpush1.bf16.msra.mxu0 0
        %479 = vmatprep.subr.bf16.mxu0 0
        %480 = vmatpush1.bf16.msra.mxu0 0
        %481 = vmatprep.subr.bf16.mxu0 0
        %482 = vmatpush1.bf16.msra.mxu0 0
        %483 = vmatprep.subr.bf16.mxu0 0
        %484 = vmatpush1.bf16.msra.mxu0 0
        %485 = vmatprep.subr.bf16.mxu0 0
        %486 = vmatpush1.bf16.msra.mxu0 0
        %487 = vmatprep.subr.bf16.mxu0 0
        %488 = vmatpush1.bf16.msra.mxu0 0
        %489 = vmatprep.subr.bf16.mxu0 0
        %490 = vmatpush1.bf16.msra.mxu0 0
        %491 = vmatprep.subr.bf16.mxu0 0
        %492 = vmatpush1.bf16.msra.mxu0 0
        %493 = vmatprep.mubr.bf16.mxu0 0
        %494 = vmatmul.mubr.bf16.gmra.mrb[0].mxu0 %v389
        %v495 = vpop.f32.mrb[0].mxu0
        %v496 = vadd.f32 %v411, %v495
        %v497 = vpop.f32.mrb[0].mxu0
        %v498 = vpop.f32.mrb[0].mxu0
        %v499 = vpop.f32.mrb[0].mxu0
        %500 = vdwg.mxu0
        %v501 = vadd.f32 %v496, %v270
        %v502 = vsub.f32 0.0, %v501
        %v503 = vmul.f32 %v502, 1.442695
        %v504 = vpow.pop %v503
        %v505 = vadd.f32 %v504, 1.0
        %v506 = vrcp.pop %v505
        %v507 = vmul.f32 %v501, %v506
        %508 = vst [vmem:[%s268] sm:$0xff] %v507
        %s509 = sand.u32 %s141, 1
        %s510 = scalar_lea.sflag [#allocation4], %s509
        %s511 = sand.u32 %s141, 1
        %s512 = smul.addr %s511, 8
        %s513 = scalar_lea.vmem [#allocation8], %s512
        // Predicated region
        $region53: #{resblock_forward.1} parent=39 // pred_check
          %p514 = pneg %p151
        $region54: #{resblock_forward.1} parent=39 // pred_check_branch
          %516 = sbr.rel (%p514) target = $region56
        $region55: #{resblock_forward.1} parent=39 // pred_region
          %s518 = ssub.s32 128, 128
          %519 = vsyncadd %s510, %s518
          %s520 = smul.addr %s23, 128
          %s521 = scalar_lea.hbm %s5, %s520
          %s523 = sshll.u32 %s513, 4
          %s524 = int_to_ptr.vmem [resolvable:$true] %s523
          %526 = dma.vmem_to_hbm [thread:$0]  %s524, 128, %s521, %s510
        $region56: #{resblock_forward.1} parent=39 // pred_fallthru
          _
      $region40: #{resblock_forward.1} parent=5 // pred_fallthru
        _
      %p527 = scmp.le.s32.totalorder 2, %s18
      // Predicated region
      $region57: #{resblock_forward.1} parent=5 // pred_check
        %p528 = pneg %p527
      $region58: #{resblock_forward.1} parent=5 // pred_check_branch
        %530 = sbr.rel (%p528) target = $region60
      $region59: #{resblock_forward.1} parent=5 // pred_region
        %s531 = ssub.s32 %s18, 2
        // Predicated region
        $region61: #{resblock_forward.1} parent=59 // pred_check
          %p532 = pneg %p157
        $region62: #{resblock_forward.1} parent=59 // pred_check_branch
          %534 = sbr.rel (%p532) target = $region64
        $region63: #{resblock_forward.1} parent=59 // pred_region
          %s535 = sand.u32 %s142, 1
          %s536 = scalar_lea.sflag [#allocation4], %s535
          %s537 = sand.u32 %s142, 1
          %s538 = smul.addr %s537, 8
          %s539 = scalar_lea.vmem [#allocation8], %s538
          %540 = dma.done %s536, 128
        $region64: #{resblock_forward.1} parent=59 // pred_fallthru
          _
      $region60: #{resblock_forward.1} parent=5 // pred_fallthru
        _
    $region6: #{resblock_forward.1} parent=1 // loop_footer
      %s22 = sadd.s32 1, %s18
    $region7: #{resblock_forward.1} parent=1 // loop_footer_branch
      %17 = sbr.rel target = $region3
    $region8: #{resblock_forward.1} parent=1 // loop_exit
      _
    %541 = vsyncpa [#allocation3], 1
    %s542 = scalar_lea.sflag [#allocation3], 1
    %543 = vsyncpa %s542, 1
    %544 = vsyncpa [#allocation6], 1
    %545 = vsyncpa [#allocation4], 1
    %s546 = scalar_lea.sflag [#allocation4], 1
    %547 = vsyncpa %s546, 1

</llo_original>
